<compile_context>
chip_gen: v6e
topology: v6e:2x2x1
jax: 0.10.0
libtpu: 0.0.40
codegen_flags: <defaults>
</compile_context>

<pallas_src>
import jax
import jax.numpy as jnp
from jax.experimental import pallas as pl
from jax.experimental.pallas import tpu as pltpu


def _make_conv3x3_kernel(with_bias):
    """3x3, stride-1, pad-1 conv on one NCHW image, lane-dense output.

    x_ref : (1, Cin, H, W)      f32   input image block (unpadded, NCHW)
    w_ref : (Cout, 9*Cin)       bf16  weight, column order (ki, kj, c)
    b_ref : (Cout, 1)           f32   (only when with_bias)
    o_ref : (1, Cout, H*W)      f32   lane-dense output
    xp_ref: (Cin, H+2, W+2)     bf16  VMEM scratch for the zero-padded image
    """

    def kernel(x_ref, w_ref, *rest):
        if with_bias:
            b_ref, o_ref, xp_ref = rest
        else:
            o_ref, xp_ref = rest

        Cin, H, W = x_ref.shape[1], x_ref.shape[2], x_ref.shape[3]

        # Zero-pad in VMEM (replaces a wrapper-side jnp.pad HBM round trip).
        xp_ref[...] = jnp.zeros_like(xp_ref)
        xp_ref[:, 1:H + 1, 1:W + 1] = x_ref[0].astype(xp_ref.dtype)
        xp = xp_ref[...]                                    # (Cin, H+2, W+2) bf16

        # im2col tap matrix (9*Cin, H*W): row index = (ki*3 + kj)*Cin + c.
        taps = [xp[:, ki:ki + H, kj:kj + W]                 # (Cin, H, W) shifted views
                for ki in range(3) for kj in range(3)]
        tap = jnp.concatenate(taps, axis=0).reshape(9 * Cin, H * W)

        # Single K = 9*Cin MXU contraction; f32 accumulation; lane-dense result.
        acc = jnp.dot(w_ref[...], tap, preferred_element_type=jnp.float32)  # (Cout, H*W)
        if with_bias:
            acc = acc + b_ref[...]                          # (Cout,1) broadcast over lanes
        o_ref[0] = acc

    return kernel


def overlap_patch_embed(x_nchw, weight, bias=None):
    """PyTorch OverlapPatchEmbed.forward: Conv2d(in_c, embed_dim, 3, 1, 1, bias=bias).

    x_nchw: (B, Cin, H, W) f32, weight: (Cout, Cin, 3, 3) f32, bias: (Cout,) or None.
    Returns (B, Cout, H, W) f32.
    """
    B, Cin, H, W = x_nchw.shape
    Cout = weight.shape[0]

    # (Cout, Cin, 3, 3) -> (Cout, ki, kj, Cin) -> (Cout, 9*Cin), bf16 MXU operand.
    w2d = jnp.transpose(weight, (0, 2, 3, 1)).reshape(Cout, 9 * Cin).astype(jnp.bfloat16)

    operands = [x_nchw, w2d]
    in_specs = [
        pl.BlockSpec((1, Cin, H, W), lambda b: (b, 0, 0, 0)),
        pl.BlockSpec((Cout, 9 * Cin), lambda b: (0, 0)),
    ]
    if bias is not None:
        operands.append(bias.reshape(Cout, 1).astype(jnp.float32))
        in_specs.append(pl.BlockSpec((Cout, 1), lambda b: (0, 0)))

    out = pl.pallas_call(
        _make_conv3x3_kernel(bias is not None),
        out_shape=jax.ShapeDtypeStruct((B, Cout, H * W), jnp.float32),
        grid=(B,),
        in_specs=in_specs,
        out_specs=pl.BlockSpec((1, Cout, H * W), lambda b: (b, 0, 0)),
        scratch_shapes=[pltpu.VMEM((Cin, H + 2, W + 2), jnp.bfloat16)],
        compiler_params=pltpu.CompilerParams(dimension_semantics=("parallel",)),
    )(*operands)

    # (B, Cout, H*W) is already channel-major: a pure metadata reshape gives NCHW.
    return out.reshape(B, Cout, H, W)


if __name__ == "__main__":
    IN_C, EMBED_DIM = 3, 48          # module defaults
    B, H, W = 2, 16, 16

    key = jax.random.PRNGKey(0)
    kx, kw, kb = jax.random.split(key, 3)
    x = jax.random.normal(kx, (B, IN_C, H, W), jnp.float32)
    weight = jax.random.normal(kw, (EMBED_DIM, IN_C, 3, 3), jnp.float32) * 0.1
    bias = jax.random.normal(kb, (EMBED_DIM,), jnp.float32) * 0.1

    fwd_nobias = jax.jit(lambda a, w: overlap_patch_embed(a, w))   # bias=False path
    fwd_bias = jax.jit(overlap_patch_embed)                        # bias=True path

    out = fwd_nobias(x, weight)
    out_b = fwd_bias(x, weight, bias)
    jax.block_until_ready((out, out_b))

    assert out.shape == (B, EMBED_DIM, H, W)
    assert out_b.shape == (B, EMBED_DIM, H, W)

    # f32 reference conv for a sanity check (bf16 MXU operands -> loose tolerance).
    ref = jax.lax.conv_general_dilated(
        x, weight, window_strides=(1, 1), padding=((1, 1), (1, 1)),
        dimension_numbers=("NCHW", "OIHW", "NCHW"))
    err = float(jnp.max(jnp.abs(out - ref)))
    err_b = float(jnp.max(jnp.abs(out_b - (ref + bias.reshape(1, EMBED_DIM, 1, 1)))))
    assert err < 5e-2 and err_b < 5e-2, (err, err_b)

    print("KERNEL_OK")
</pallas_src>

<mosaic_0001>
module attributes {stable_mosaic.version = 11 : i64} {
  func.func @kernel(%arg0: i32, %arg1: memref<1x3x16x16xf32, #tpu.memory_space<vmem>>, %arg2: memref<48x27xbf16, #tpu.memory_space<vmem>>, %arg3: memref<1x48x256xf32, #tpu.memory_space<vmem>>, %arg4: memref<3x18x18xbf16, #tpu.memory_space<vmem>>) attributes {dimension_semantics = [#tpu.dimension_semantics<parallel>], iteration_bounds = array<i64: 2>, scalar_prefetch = 0 : i64, scratch_operands = 1 : i64, tpu.core_type = #tpu.core_type<tc>, window_params = [{transform_indices = @transform_0, window_bounds = array<i64: 1, 3, 16, 16>}, {pipeline_mode = #tpu.pipeline_mode<synchronous>, transform_indices = @transform_1, window_bounds = array<i64: 48, 27>}, {transform_indices = @transform_2, window_bounds = array<i64: 1, 48, 256>}]} {
    %cst = arith.constant 0.000000e+00 : bf16
    %0 = vector.broadcast %cst : bf16 to vector<3x18x18xbf16>
    %c0 = arith.constant 0 : index
    %c0_0 = arith.constant 0 : index
    %c0_1 = arith.constant 0 : index
    %1 = vector.load %arg4[%c0, %c0_0, %c0_1] : memref<3x18x18xbf16, #tpu.memory_space<vmem>>, vector<3x18x18xbf16>
    tpu.vector_store %arg4[%c0, %c0_0, %c0_1], %0 {strides = array<i32>} : memref<3x18x18xbf16, #tpu.memory_space<vmem>>, vector<3x18x18xbf16>,
    %c0_2 = arith.constant 0 : index
    %c0_3 = arith.constant 0 : index
    %c0_4 = arith.constant 0 : index
    %c0_5 = arith.constant 0 : index
    %2 = vector.load %arg1[%c0_2, %c0_3, %c0_4, %c0_5] : memref<1x3x16x16xf32, #tpu.memory_space<vmem>>, vector<1x3x16x16xf32>
    %3 = vector.shape_cast %2 : vector<1x3x16x16xf32> to vector<3x16x16xf32>
    %4 = arith.truncf %3 : vector<3x16x16xf32> to vector<3x16x16xbf16>
    %c0_6 = arith.constant 0 : index
    %c1 = arith.constant 1 : index
    %c1_7 = arith.constant 1 : index
    %5 = vector.load %arg4[%c0_6, %c1, %c1_7] : memref<3x18x18xbf16, #tpu.memory_space<vmem>>, vector<3x16x16xbf16>
    tpu.vector_store %arg4[%c0_6, %c1, %c1_7], %4 {strides = array<i32>} : memref<3x18x18xbf16, #tpu.memory_space<vmem>>, vector<3x16x16xbf16>,
    %c0_8 = arith.constant 0 : index
    %c0_9 = arith.constant 0 : index
    %c0_10 = arith.constant 0 : index
    %6 = vector.load %arg4[%c0_8, %c0_9, %c0_10] : memref<3x18x18xbf16, #tpu.memory_space<vmem>>, vector<3x18x18xbf16>
    %7 = vector.extract_strided_slice %6 {offsets = [0, 0, 0], sizes = [3, 16, 16], strides = [1, 1, 1]} : vector<3x18x18xbf16> to vector<3x16x16xbf16>
    %8 = vector.extract_strided_slice %6 {offsets = [0, 0, 1], sizes = [3, 16, 16], strides = [1, 1, 1]} : vector<3x18x18xbf16> to vector<3x16x16xbf16>
    %9 = vector.extract_strided_slice %6 {offsets = [0, 0, 2], sizes = [3, 16, 16], strides = [1, 1, 1]} : vector<3x18x18xbf16> to vector<3x16x16xbf16>
    %10 = vector.extract_strided_slice %6 {offsets = [0, 1, 0], sizes = [3, 16, 16], strides = [1, 1, 1]} : vector<3x18x18xbf16> to vector<3x16x16xbf16>
    %11 = vector.extract_strided_slice %6 {offsets = [0, 1, 1], sizes = [3, 16, 16], strides = [1, 1, 1]} : vector<3x18x18xbf16> to vector<3x16x16xbf16>
    %12 = vector.extract_strided_slice %6 {offsets = [0, 1, 2], sizes = [3, 16, 16], strides = [1, 1, 1]} : vector<3x18x18xbf16> to vector<3x16x16xbf16>
    %13 = vector.extract_strided_slice %6 {offsets = [0, 2, 0], sizes = [3, 16, 16], strides = [1, 1, 1]} : vector<3x18x18xbf16> to vector<3x16x16xbf16>
    %14 = vector.extract_strided_slice %6 {offsets = [0, 2, 1], sizes = [3, 16, 16], strides = [1, 1, 1]} : vector<3x18x18xbf16> to vector<3x16x16xbf16>
    %15 = vector.extract_strided_slice %6 {offsets = [0, 2, 2], sizes = [3, 16, 16], strides = [1, 1, 1]} : vector<3x18x18xbf16> to vector<3x16x16xbf16>
    %16 = tpu.concatenate %7, %8, %9, %10, %11, %12, %13, %14, %15 in 0 : vector<3x16x16xbf16>, vector<3x16x16xbf16>, vector<3x16x16xbf16>, vector<3x16x16xbf16>, vector<3x16x16xbf16>, vector<3x16x16xbf16>, vector<3x16x16xbf16>, vector<3x16x16xbf16>, vector<3x16x16xbf16> -> vector<27x16x16xbf16>
    %17 = vector.shape_cast %16 : vector<27x16x16xbf16> to vector<27x256xbf16>
    %c0_11 = arith.constant 0 : index
    %c0_12 = arith.constant 0 : index
    %18 = vector.load %arg2[%c0_11, %c0_12] : memref<48x27xbf16, #tpu.memory_space<vmem>>, vector<48x27xbf16>
    %cst_13 = arith.constant dense<0.000000e+00> : vector<48x256xf32>
    %19 = tpu.matmul %18, %17, %cst_13 {dimension_numbers = #tpu.dot_dimension_numbers<[1], [0], [0], [1], [0, 0, 1, 1], [], []>} : vector<48x27xbf16>, vector<27x256xbf16>, vector<48x256xf32> -> vector<48x256xf32>
    %c0_14 = arith.constant 0 : index
    %c0_15 = arith.constant 0 : index
    %c0_16 = arith.constant 0 : index
    %20 = vector.load %arg3[%c0_14, %c0_15, %c0_16] : memref<1x48x256xf32, #tpu.memory_space<vmem>>, vector<1x48x256xf32>
    %21 = vector.shape_cast %20 : vector<1x48x256xf32> to vector<48x256xf32>
    %22 = vector.shape_cast %19 : vector<48x256xf32> to vector<1x48x256xf32>
    tpu.vector_store %arg3[%c0_14, %c0_15, %c0_16], %22 {strides = array<i32>} : memref<1x48x256xf32, #tpu.memory_space<vmem>>, vector<1x48x256xf32>,
    return
  }
  func.func @transform_0(%arg0: i32) -> (i32, i32, i32, i32) {
    %c0_i32 = arith.constant 0 : i32
    %c0_i32_0 = arith.constant 0 : i32
    %c0_i32_1 = arith.constant 0 : i32
    %c0_i32_2 = arith.constant 0 : i32
    return %arg0, %c0_i32, %c0_i32_0, %c0_i32_1 : i32, i32, i32, i32
  }
  func.func @transform_1(%arg0: i32) -> (i32, i32) {
    %c0_i32 = arith.constant 0 : i32
    %c0_i32_0 = arith.constant 0 : i32
    %c0_i32_1 = arith.constant 0 : i32
    return %c0_i32, %c0_i32_0 : i32, i32
  }
  func.func @transform_2(%arg0: i32) -> (i32, i32, i32) {
    %c0_i32 = arith.constant 0 : i32
    %c0_i32_0 = arith.constant 0 : i32
    %c0_i32_1 = arith.constant 0 : i32
    return %arg0, %c0_i32, %c0_i32_0 : i32, i32, i32
  }
}

</mosaic_0001>

<llo_original>
// kernel: _lambda_.1
$region0: #{_lambda_.1}
  #allocation0 [shape = 'u32[]', space=smem, size = 0x4, offset = 0x4, fixed_abs, tag = 'smem constant byte address 0x4 - core index']
  #allocation1 [shape = 'u32[144,128]{1,0:T(1,128)}', space=vmem, size = 0x12000, scoped, tag = 'internal scratch']
  #allocation2 [shape = 'bf16[3,18,18]{2,1,0:T(8,128)(2,1)}', space=vmem, size = 0x4800, scoped, tag = 'scratch operand']
  %s0 = inlined_call_operand.vmem [shape: f32[2,3,16,16], index: 0, kind: input, shape index: {}]
  %s1 = inlined_call_operand.vmem [shape: bf16[48,27], index: 1, kind: input, shape index: {}]
  %s2 = inlined_call_operand.vmem [shape: f32[2,48,256], index: 2, kind: output, shape index: {}]
  %s3 = sld [smem:[#allocation0]]
  $region41: #{_lambda_.1} parent=0
    _
  %s5 = ssub.s32 1, %s3
  %s6 = scalar_select 0, %s5, %s3
  loop: start=0, step=1, limit=4
  $region2: #{_lambda_.1} parent=0 // loop_pre_header
    _
  $region3: #{_lambda_.1} parent=0 // loop_header
    %s8 = sphi 0, %s12
    %p9 = scmp.ge.s32.totalorder %s8, 4
    %s18 = sphi 0, %s20
    %s21 = sphi 0, %s18
    %s22 = sphi 0, %s21
    %s38 = sphi 0, %s22
    %s42 = sphi 0, %s42
    %s44 = sphi 0, %s42
    %s45 = sphi 0, %s44
    %s59 = sphi 0, %s45
    %s65 = sphi 0, %s67
    %s68 = sphi 0, %s65
    %s69 = sphi 0, %s68
    %s85 = sphi 0, %s69
  $region4: #{_lambda_.1} parent=0 // loop_header_branch
    %11 = sbr.rel (%p9) target = $region8
  $region5: #{_lambda_.1} parent=0 // loop_body
    %s13 = ssub.s32 %s8, 1
    %s14 = ssub.s32 %s8, 2
    %s15 = sadd.s32 %s8, 1
    %s16 = ssub.s32 %s8, %s15
    %p17 = scmp.eq.s32.totalorder %s16, 0
    %s19 = sadd.s32 %s18, 1
    %s20 = scalar_select %p17, %s18, %s19
    %p23 = pneg %p17
    %p24 = scmp.eq.s32.totalorder %s8, 1
    %p25 = por %p23, %p24
    %p26 = scmp.ne.s32.totalorder %s18, %s21
    %p27 = scmp.eq.s32.totalorder %s8, 0
    %p28 = por %p26, %p27
    %p29 = scmp.ne.s32.totalorder %s18, %s21
    %p30 = scmp.eq.s32.totalorder %s13, 1
    %p31 = por %p29, %p30
    %p32 = scmp.ne.s32.totalorder %s21, %s22
    %p33 = scmp.eq.s32.totalorder %s13, 0
    %p34 = por %p32, %p33
    %p35 = scmp.ne.s32.totalorder %s21, %s22
    %p36 = scmp.eq.s32.totalorder %s14, 1
    %p37 = por %p35, %p36
    %p39 = scmp.ne.s32.totalorder %s22, %s38
    %p40 = scmp.eq.s32.totalorder %s14, 0
    %p41 = por %p39, %p40
    %s43 = sadd.s32 %s42, 1
    %p46 = scmp.eq.s32.totalorder %s8, 1
    %p47 = scmp.ne.s32.totalorder %s42, %s44
    %p48 = scmp.eq.s32.totalorder %s8, 0
    %p49 = por %p47, %p48
    %p50 = scmp.ne.s32.totalorder %s42, %s44
    %p51 = scmp.eq.s32.totalorder %s13, 1
    %p52 = por %p50, %p51
    %p53 = scmp.ne.s32.totalorder %s44, %s45
    %p54 = scmp.eq.s32.totalorder %s13, 0
    %p55 = por %p53, %p54
    %p56 = scmp.ne.s32.totalorder %s44, %s45
    %p57 = scmp.eq.s32.totalorder %s14, 1
    %p58 = por %p56, %p57
    %p60 = scmp.ne.s32.totalorder %s45, %s59
    %p61 = scmp.eq.s32.totalorder %s14, 0
    %p62 = por %p60, %p61
    %s63 = ssub.s32 %s8, %s15
    %p64 = scmp.eq.s32.totalorder %s63, 0
    %s66 = sadd.s32 %s65, 1
    %s67 = scalar_select %p64, %s65, %s66
    %p70 = pneg %p64
    %p71 = scmp.eq.s32.totalorder %s8, 1
    %p72 = por %p70, %p71
    %p73 = scmp.ne.s32.totalorder %s65, %s68
    %p74 = scmp.eq.s32.totalorder %s8, 0
    %p75 = por %p73, %p74
    %p76 = scmp.ne.s32.totalorder %s65, %s68
    %p77 = scmp.eq.s32.totalorder %s13, 1
    %p78 = por %p76, %p77
    %p79 = scmp.ne.s32.totalorder %s68, %s69
    %p80 = scmp.eq.s32.totalorder %s13, 0
    %p81 = por %p79, %p80
    %p82 = scmp.ne.s32.totalorder %s68, %s69
    %p83 = scmp.eq.s32.totalorder %s14, 1
    %p84 = por %p82, %p83
    %p86 = scmp.ne.s32.totalorder %s69, %s85
    %p87 = scmp.eq.s32.totalorder %s14, 0
    %p88 = por %p86, %p87
    %p89 = scmp.le.s32.totalorder 1, %s8
    %p90 = scmp.lt.s32.totalorder %s8, 3
    %p91 = pnand %p89, %p90
    %p92 = pneg %p91
    // Predicated region
    $region9: #{_lambda_.1} parent=5 // pred_check
      _
    $region10: #{_lambda_.1} parent=5 // pred_check_branch
      %94 = sbr.rel (%p91) target = $region12
    $region11: #{_lambda_.1} parent=5 // pred_region
      %s95 = ssub.s32 %s8, 1
      // Predicated region
      $region13: #{_lambda_.1} parent=11 // pred_check
        %p96 = pneg %p55
      $region14: #{_lambda_.1} parent=11 // pred_check_branch
        %98 = sbr.rel (%p96) target = $region16
      $region15: #{_lambda_.1} parent=11 // pred_region
        _
      $region16: #{_lambda_.1} parent=11 // pred_fallthru
        _
    $region12: #{_lambda_.1} parent=5 // pred_fallthru
      _
    %p99 = scmp.lt.s32.totalorder %s8, 2
    // Predicated region
    $region17: #{_lambda_.1} parent=5 // pred_check
      %p100 = pneg %p99
    $region18: #{_lambda_.1} parent=5 // pred_check_branch
      %102 = sbr.rel (%p100) target = $region20
    $region19: #{_lambda_.1} parent=5 // pred_region
      // Predicated region
      $region21: #{_lambda_.1} parent=19 // pred_check
        %p103 = pneg %p28
      $region22: #{_lambda_.1} parent=19 // pred_check_branch
        %105 = sbr.rel (%p103) target = $region24
      $region23: #{_lambda_.1} parent=19 // pred_region
        %p106 = scmp.lt.s32.totalorder %s8, 1
        %s107 = scalar_select %p106, %s8, 1
        %s108 = smul.addr %s107, 6
        %s109 = smul.addr %s108, 8
        %s110 = scalar_lea.vmem %s0, %s109
      $region24: #{_lambda_.1} parent=19 // pred_fallthru
        _
    $region20: #{_lambda_.1} parent=5 // pred_fallthru
      _
    %p111 = scmp.le.s32.totalorder 1, %s8
    %p112 = scmp.lt.s32.totalorder %s8, 3
    %p113 = pnand %p111, %p112
    %p114 = pneg %p113
    // Predicated region
    $region25: #{_lambda_.1} parent=5 // pred_check
      _
    $region26: #{_lambda_.1} parent=5 // pred_check_branch
      %116 = sbr.rel (%p113) target = $region28
    $region27: #{_lambda_.1} parent=5 // pred_region
      %s117 = ssub.s32 %s8, 1
      %p118 = scmp.lt.s32.totalorder %s13, 1
      %s119 = scalar_select %p118, %s13, 1
      %s120 = smul.addr %s119, 6
      %s121 = smul.addr %s120, 8
      %s122 = scalar_lea.vmem %s0, %s121
      %p123 = pneg %p34
      %p124 = pneg %p31
      %p125 = pneg %p55
      %p126 = pneg %p52
      %p127 = pneg %p81
      %p128 = pneg %p78
      %p129 = scmp.lt.s32.totalorder %s13, 1
      %s130 = scalar_select %p129, %s13, 1
      %s131 = smul.addr %s130, 12
      %s132 = smul.addr %s131, 8
      %s133 = scalar_lea.vmem %s2, %s132
      %p134 = scmp.lt.s32.totalorder %s13, 1
      %s135 = scalar_select %p134, %s13, 1
      %s136 = smul.addr %s135, 6
      %s137 = smul.addr %s136, 8
      %s138 = scalar_lea.vmem %s0, %s137
      %p139 = scmp.lt.s32.totalorder %s13, 1
      %s140 = scalar_select %p139, %s13, 1
      %s141 = smul.addr %s140, 12
      %s142 = smul.addr %s141, 8
      %s143 = scalar_lea.vmem %s2, %s142
      %vm145 = vcmask 142336
      %146 = vst.msk [vmem:[#allocation2] sm:$0xf] %vm145, 0
      %147 = vst.msk [vmem:[#allocation2 + $0x4] sm:$0xf] %vm145, 0
      %vm148 = vcmask 139264
      %149 = vst.msk [vmem:[#allocation2 + $0x8] sm:$0x1] %vm148, 0
      %150 = vst.msk [vmem:[#allocation2 + $0xc] sm:$0xf] %vm145, 0
      %151 = vst.msk [vmem:[#allocation2 + $0x10] sm:$0xf] %vm145, 0
      %152 = vst.msk [vmem:[#allocation2 + $0x14] sm:$0x1] %vm148, 0
      %153 = vst.msk [vmem:[#allocation2 + $0x18] sm:$0xf] %vm145, 0
      %154 = vst.msk [vmem:[#allocation2 + $0x1c] sm:$0xf] %vm145, 0
      %155 = vst.msk [vmem:[#allocation2 + $0x20] sm:$0x1] %vm148, 0
      %v156 = vld [vmem:[%s138] sm:$0xff]
      %v157 = vld [vmem:[%s138 + $0x8] sm:$0xff]
      %v158 = vld [vmem:[%s138 + $0x10] sm:$0xff]
      %v159 = vld [vmem:[%s138 + $0x18] sm:$0xff]
      %v160 = vld [vmem:[%s138 + $0x20] sm:$0xff]
      %v161 = vld [vmem:[%s138 + $0x28] sm:$0xff]
      %v162 = vpack.c.bf16 %v157, %v156
      %v163 = vpack.c.bf16 %v159, %v158
      %v164 = vpack.c.bf16 %v161, %v160
      %v168 = vunpack.c.l.b16 %v162
      %v169 = vunpack.c.h.b16 %v162
      %v170 = vunpack.c.l.b16 %v163
      %v171 = vunpack.c.h.b16 %v163
      %v172 = vunpack.c.l.b16 %v164
      %v173 = vunpack.c.h.b16 %v164
      %v174 = vpack.c.b16 %v168, %v168
      %v175 = vpack.c.b16 %v169, %v169
      %v176 = vpack.c.b16 %v170, %v170
      %v177 = vpack.c.b16 %v171, %v171
      %v178 = vpack.c.b16 %v172, %v172
      %v179 = vpack.c.b16 %v173, %v173
      %vm180 = vsmask.f32 256
      %vm181 = vsmask.f32 4368
      %vm182 = vmor %vm180, %vm181
      %v184 = vshrl.u32 %v174, 16
      %v186 = vrot.slane %v184, 7
      %v187 = vshll.u32 %v174, 16
      %v189 = vor.u32 %v186, %v187
      %v190 = vrot.slane %v186, 4
      %v192 = vshrl.u32 %v175, 16
      %v194 = vrot.slane %v192, 7
      %v195 = vshll.u32 %v175, 16
      %v197 = vor.u32 %v194, %v195
      %v198 = vsel %vm182, %v190, %v197
      %v199 = vrot.slane %v194, 4
      %v201 = vshrl.u32 %v176, 16
      %v203 = vrot.slane %v201, 7
      %v204 = vshll.u32 %v176, 16
      %v206 = vor.u32 %v203, %v204
      %v207 = vrot.slane %v203, 4
      %v209 = vshrl.u32 %v177, 16
      %v211 = vrot.slane %v209, 7
      %v212 = vshll.u32 %v177, 16
      %v214 = vor.u32 %v211, %v212
      %v215 = vsel %vm182, %v207, %v214
      %v216 = vrot.slane %v211, 4
      %v218 = vshrl.u32 %v178, 16
      %v220 = vrot.slane %v218, 7
      %v221 = vshll.u32 %v178, 16
      %v223 = vor.u32 %v220, %v221
      %v224 = vrot.slane %v220, 4
      %v226 = vshrl.u32 %v179, 16
      %v228 = vrot.slane %v226, 7
      %v229 = vshll.u32 %v179, 16
      %v231 = vor.u32 %v228, %v229
      %v232 = vsel %vm182, %v224, %v231
      %v233 = vrot.slane %v228, 4
      %234 = vrot.lane.b32.xlu0 %v189, 1
      %v235 = vpop.permute.xlu0 %234
      %236 = vrot.lane.b32.xlu0 %v198, 1
      %v237 = vpop.permute.xlu0 %236
      %238 = vrot.lane.b32.xlu0 %v199, 1
      %v239 = vpop.permute.xlu0 %238
      %240 = vrot.lane.b32.xlu0 %v206, 1
      %v241 = vpop.permute.xlu0 %240
      %242 = vrot.lane.b32.xlu0 %v215, 1
      %v243 = vpop.permute.xlu0 %242
      %244 = vrot.lane.b32.xlu0 %v216, 1
      %v245 = vpop.permute.xlu0 %244
      %246 = vrot.lane.b32.xlu0 %v223, 1
      %v247 = vpop.permute.xlu0 %246
      %248 = vrot.lane.b32.xlu0 %v232, 1
      %v249 = vpop.permute.xlu0 %248
      %250 = vrot.lane.b32.xlu0 %v233, 1
      %v251 = vpop.permute.xlu0 %250
      %vm261 = vcmask 134152
      %vm262 = vsmask.f32 7938
      %vm263 = vmand %vm261, %vm262
      %v264 = vld [vmem:[#allocation2] sm:$0xf]
      %v265 = vsel %vm263, %v235, %v264
      %266 = vst [vmem:[#allocation2] sm:$0xf] %v265
      %vm267 = vcmask 134152
      %268 = vst.msk [vmem:[#allocation2 + $0x4] sm:$0xf] %vm267, %v237
      %vm269 = vcmask 131080
      %vm270 = vmand %vm269, %vm180
      %v271 = vld [vmem:[#allocation2 + $0x8] sm:$0x1]
      %v272 = vsel %vm270, %v239, %v271
      %273 = vst [vmem:[#allocation2 + $0x8] sm:$0x1] %v272
      %v274 = vld [vmem:[#allocation2 + $0xc] sm:$0xf]
      %v275 = vsel %vm263, %v241, %v274
      %276 = vst [vmem:[#allocation2 + $0xc] sm:$0xf] %v275
      %277 = vst.msk [vmem:[#allocation2 + $0x10] sm:$0xf] %vm267, %v243
      %v278 = vld [vmem:[#allocation2 + $0x14] sm:$0x1]
      %v279 = vsel %vm270, %v245, %v278
      %280 = vst [vmem:[#allocation2 + $0x14] sm:$0x1] %v279
      %v281 = vld [vmem:[#allocation2 + $0x18] sm:$0xf]
      %v282 = vsel %vm263, %v247, %v281
      %283 = vst [vmem:[#allocation2 + $0x18] sm:$0xf] %v282
      %284 = vst.msk [vmem:[#allocation2 + $0x1c] sm:$0xf] %vm267, %v249
      %v285 = vld [vmem:[#allocation2 + $0x20] sm:$0x1]
      %v286 = vsel %vm270, %v251, %v285
      %287 = vst [vmem:[#allocation2 + $0x20] sm:$0x1] %v286
      %v288 = vld [vmem:[#allocation2] sm:$0xf]
      %v289 = vld [vmem:[#allocation2 + $0x4] sm:$0xf]
      %v290 = vld [vmem:[#allocation2 + $0x8] sm:$0x1]
      %v291 = vld [vmem:[#allocation2 + $0xc] sm:$0xf]
      %v292 = vld [vmem:[#allocation2 + $0x10] sm:$0xf]
      %v293 = vld [vmem:[#allocation2 + $0x14] sm:$0x1]
      %v294 = vld [vmem:[#allocation2 + $0x18] sm:$0xf]
      %v295 = vld [vmem:[#allocation2 + $0x1c] sm:$0xf]
      %v296 = vld [vmem:[#allocation2 + $0x20] sm:$0x1]
      %303 = vrot.lane.b32.xlu0 %v288, 127
      %v304 = vpop.permute.xlu0 %303
      %305 = vrot.lane.b32.xlu0 %v289, 127
      %v306 = vpop.permute.xlu0 %305
      %307 = vrot.lane.b32.xlu0 %v291, 127
      %v308 = vpop.permute.xlu0 %307
      %309 = vrot.lane.b32.xlu0 %v292, 127
      %v310 = vpop.permute.xlu0 %309
      %311 = vrot.lane.b32.xlu0 %v294, 127
      %v312 = vpop.permute.xlu0 %311
      %313 = vrot.lane.b32.xlu0 %v295, 127
      %v314 = vpop.permute.xlu0 %313
      %315 = vrot.lane.b32.xlu0 %v288, 126
      %v316 = vpop.permute.xlu0 %315
      %317 = vrot.lane.b32.xlu0 %v289, 126
      %v318 = vpop.permute.xlu0 %317
      %319 = vrot.lane.b32.xlu0 %v291, 126
      %v320 = vpop.permute.xlu0 %319
      %321 = vrot.lane.b32.xlu0 %v292, 126
      %v322 = vpop.permute.xlu0 %321
      %323 = vrot.lane.b32.xlu0 %v294, 126
      %v324 = vpop.permute.xlu0 %323
      %325 = vrot.lane.b32.xlu0 %v295, 126
      %v326 = vpop.permute.xlu0 %325
      %vm327 = vsmask.f32 3328
      %vm328 = vsmask.f32 7440
      %vm329 = vmor %vm327, %vm328
      %v331 = vshrl.u32 %v288, 16
      %v333 = vrot.slane %v331, 4
      %v334 = vshll.u32 %v288, 16
      %v336 = vrot.slane %v334, 5
      %v337 = vor.u32 %v333, %v336
      %v338 = vrot.slane %v337, 4
      %v340 = vshll.u32 %v289, 16
      %v342 = vrot.slane %v340, 5
      %v343 = vsel %vm329, %v338, %v342
      %v344 = vshrl.u32 %v289, 16
      %v346 = vrot.slane %v344, 4
      %v347 = vor.u32 %v346, %v342
      %v348 = vrot.slane %v347, 4
      %v350 = vshll.u32 %v290, 16
      %v352 = vrot.slane %v350, 5
      %v353 = vsel %vm329, %v348, %v352
      %v355 = vshrl.u32 %v291, 16
      %v357 = vrot.slane %v355, 4
      %v358 = vshll.u32 %v291, 16
      %v360 = vrot.slane %v358, 5
      %v361 = vor.u32 %v357, %v360
      %v362 = vrot.slane %v361, 4
      %v364 = vshll.u32 %v292, 16
      %v366 = vrot.slane %v364, 5
      %v367 = vsel %vm329, %v362, %v366
      %v368 = vshrl.u32 %v292, 16
      %v370 = vrot.slane %v368, 4
      %v371 = vor.u32 %v370, %v366
      %v372 = vrot.slane %v371, 4
      %v374 = vshll.u32 %v293, 16
      %v376 = vrot.slane %v374, 5
      %v377 = vsel %vm329, %v372, %v376
      %v379 = vshrl.u32 %v294, 16
      %v381 = vrot.slane %v379, 4
      %v382 = vshll.u32 %v294, 16
      %v384 = vrot.slane %v382, 5
      %v385 = vor.u32 %v381, %v384
      %v386 = vrot.slane %v385, 4
      %v388 = vshll.u32 %v295, 16
      %v390 = vrot.slane %v388, 5
      %v391 = vsel %vm329, %v386, %v390
      %v392 = vshrl.u32 %v295, 16
      %v394 = vrot.slane %v392, 4
      %v395 = vor.u32 %v394, %v390
      %v396 = vrot.slane %v395, 4
      %v398 = vshll.u32 %v296, 16
      %v400 = vrot.slane %v398, 5
      %v401 = vsel %vm329, %v396, %v400
      %402 = vrot.lane.b32.xlu0 %v343, 127
      %v403 = vpop.permute.xlu0 %402
      %404 = vrot.lane.b32.xlu0 %v353, 127
      %v405 = vpop.permute.xlu0 %404
      %406 = vrot.lane.b32.xlu0 %v367, 127
      %v407 = vpop.permute.xlu0 %406
      %408 = vrot.lane.b32.xlu0 %v377, 127
      %v409 = vpop.permute.xlu0 %408
      %410 = vrot.lane.b32.xlu0 %v391, 127
      %v411 = vpop.permute.xlu0 %410
      %412 = vrot.lane.b32.xlu0 %v401, 127
      %v413 = vpop.permute.xlu0 %412
      %414 = vrot.lane.b32.xlu0 %v343, 126
      %v415 = vpop.permute.xlu0 %414
      %416 = vrot.lane.b32.xlu0 %v353, 126
      %v417 = vpop.permute.xlu0 %416
      %418 = vrot.lane.b32.xlu0 %v367, 126
      %v419 = vpop.permute.xlu0 %418
      %420 = vrot.lane.b32.xlu0 %v377, 126
      %v421 = vpop.permute.xlu0 %420
      %422 = vrot.lane.b32.xlu0 %v391, 126
      %v423 = vpop.permute.xlu0 %422
      %424 = vrot.lane.b32.xlu0 %v401, 126
      %v425 = vpop.permute.xlu0 %424
      %vm429 = vcmask 1042432
      %vm430 = vcmask 1046532
      %vm431 = vmor %vm429, %vm430
      %v432 = vrot.slane %v288, 5
      %v433 = vrot.slane %v432, 4
      %v434 = vrot.slane %v289, 5
      %v435 = vsel %vm431, %v433, %v434
      %v436 = vrot.slane %v434, 4
      %v437 = vrot.slane %v290, 5
      %v438 = vsel %vm431, %v436, %v437
      %v439 = vrot.slane %v291, 5
      %v440 = vrot.slane %v439, 4
      %v441 = vrot.slane %v292, 5
      %v442 = vsel %vm431, %v440, %v441
      %v443 = vrot.slane %v441, 4
      %v444 = vrot.slane %v293, 5
      %v445 = vsel %vm431, %v443, %v444
      %v446 = vrot.slane %v294, 5
      %v447 = vrot.slane %v446, 4
      %v448 = vrot.slane %v295, 5
      %v449 = vsel %vm431, %v447, %v448
      %v450 = vrot.slane %v448, 4
      %v451 = vrot.slane %v296, 5
      %v452 = vsel %vm431, %v450, %v451
      %453 = vrot.lane.b32.xlu0 %v435, 127
      %v454 = vpop.permute.xlu0 %453
      %455 = vrot.lane.b32.xlu0 %v438, 127
      %v456 = vpop.permute.xlu0 %455
      %457 = vrot.lane.b32.xlu0 %v442, 127
      %v458 = vpop.permute.xlu0 %457
      %459 = vrot.lane.b32.xlu0 %v445, 127
      %v460 = vpop.permute.xlu0 %459
      %461 = vrot.lane.b32.xlu0 %v449, 127
      %v462 = vpop.permute.xlu0 %461
      %463 = vrot.lane.b32.xlu0 %v452, 127
      %v464 = vpop.permute.xlu0 %463
      %465 = vrot.lane.b32.xlu0 %v435, 126
      %v466 = vpop.permute.xlu0 %465
      %467 = vrot.lane.b32.xlu0 %v438, 126
      %v468 = vpop.permute.xlu0 %467
      %469 = vrot.lane.b32.xlu0 %v442, 126
      %v470 = vpop.permute.xlu0 %469
      %471 = vrot.lane.b32.xlu0 %v445, 126
      %v472 = vpop.permute.xlu0 %471
      %473 = vrot.lane.b32.xlu0 %v449, 126
      %v474 = vpop.permute.xlu0 %473
      %475 = vrot.lane.b32.xlu0 %v452, 126
      %v476 = vpop.permute.xlu0 %475
      %v477 = vpack.i.b16 %v291, %v288
      %v479 = vpack.i.b16 %v355, %v331
      %v482 = vpack.i.b16 %v304, %v294
      %v484 = vshrl.u32 %v304, 16
      %v485 = vpack.i.b16 %v484, %v379
      %v489 = vpack.i.b16 %v312, %v308
      %v491 = vshrl.u32 %v308, 16
      %v492 = vshrl.u32 %v312, 16
      %v493 = vpack.i.b16 %v492, %v491
      %v497 = vpack.i.b16 %v320, %v316
      %v499 = vshrl.u32 %v316, 16
      %v500 = vshrl.u32 %v320, 16
      %v501 = vpack.i.b16 %v500, %v499
      %v505 = vpack.i.b16 %v343, %v324
      %v507 = vshrl.u32 %v324, 16
      %v508 = vshrl.u32 %v343, 16
      %v509 = vpack.i.b16 %v508, %v507
      %v513 = vpack.i.b16 %v391, %v367
      %v515 = vshrl.u32 %v367, 16
      %v516 = vshrl.u32 %v391, 16
      %v517 = vpack.i.b16 %v516, %v515
      %v521 = vpack.i.b16 %v407, %v403
      %v523 = vshrl.u32 %v403, 16
      %v524 = vshrl.u32 %v407, 16
      %v525 = vpack.i.b16 %v524, %v523
      %v529 = vpack.i.b16 %v415, %v411
      %v531 = vshrl.u32 %v411, 16
      %v532 = vshrl.u32 %v415, 16
      %v533 = vpack.i.b16 %v532, %v531
      %v537 = vpack.i.b16 %v423, %v419
      %v539 = vshrl.u32 %v419, 16
      %v540 = vshrl.u32 %v423, 16
      %v541 = vpack.i.b16 %v540, %v539
      %v545 = vpack.i.b16 %v442, %v435
      %v547 = vshrl.u32 %v435, 16
      %v548 = vshrl.u32 %v442, 16
      %v549 = vpack.i.b16 %v548, %v547
      %v553 = vpack.i.b16 %v454, %v449
      %v555 = vshrl.u32 %v449, 16
      %v556 = vshrl.u32 %v454, 16
      %v557 = vpack.i.b16 %v556, %v555
      %v561 = vpack.i.b16 %v462, %v458
      %v563 = vshrl.u32 %v458, 16
      %v564 = vshrl.u32 %v462, 16
      %v565 = vpack.i.b16 %v564, %v563
      %v569 = vpack.i.b16 %v470, %v466
      %v570 = vshrl.u32 %v466, 16
      %v571 = vshrl.u32 %v470, 16
      %v572 = vpack.i.b16 %v571, %v570
      %v575 = vpack.i.b16 0, %v474
      %v576 = vshrl.u32 %v474, 16
      %v577 = vshrl.u32 0, 16
      %v578 = vpack.i.b16 %v577, %v576
      %v579 = vpack.i.b16 %v292, %v289
      %v581 = vpack.i.b16 %v368, %v344
      %v584 = vpack.i.b16 %v306, %v295
      %v586 = vshrl.u32 %v306, 16
      %v587 = vpack.i.b16 %v586, %v392
      %v591 = vpack.i.b16 %v314, %v310
      %v593 = vshrl.u32 %v310, 16
      %v594 = vshrl.u32 %v314, 16
      %v595 = vpack.i.b16 %v594, %v593
      %v599 = vpack.i.b16 %v322, %v318
      %v601 = vshrl.u32 %v318, 16
      %v602 = vshrl.u32 %v322, 16
      %v603 = vpack.i.b16 %v602, %v601
      %v607 = vpack.i.b16 %v353, %v326
      %v609 = vshrl.u32 %v326, 16
      %v610 = vshrl.u32 %v353, 16
      %v611 = vpack.i.b16 %v610, %v609
      %v615 = vpack.i.b16 %v401, %v377
      %v617 = vshrl.u32 %v377, 16
      %v618 = vshrl.u32 %v401, 16
      %v619 = vpack.i.b16 %v618, %v617
      %v623 = vpack.i.b16 %v409, %v405
      %v625 = vshrl.u32 %v405, 16
      %v626 = vshrl.u32 %v409, 16
      %v627 = vpack.i.b16 %v626, %v625
      %v631 = vpack.i.b16 %v417, %v413
      %v633 = vshrl.u32 %v413, 16
      %v634 = vshrl.u32 %v417, 16
      %v635 = vpack.i.b16 %v634, %v633
      %v639 = vpack.i.b16 %v425, %v421
      %v641 = vshrl.u32 %v421, 16
      %v642 = vshrl.u32 %v425, 16
      %v643 = vpack.i.b16 %v642, %v641
      %v647 = vpack.i.b16 %v445, %v438
      %v649 = vshrl.u32 %v438, 16
      %v650 = vshrl.u32 %v445, 16
      %v651 = vpack.i.b16 %v650, %v649
      %v655 = vpack.i.b16 %v456, %v452
      %v657 = vshrl.u32 %v452, 16
      %v658 = vshrl.u32 %v456, 16
      %v659 = vpack.i.b16 %v658, %v657
      %v663 = vpack.i.b16 %v464, %v460
      %v665 = vshrl.u32 %v460, 16
      %v666 = vshrl.u32 %v464, 16
      %v667 = vpack.i.b16 %v666, %v665
      %v671 = vpack.i.b16 %v472, %v468
      %v672 = vshrl.u32 %v468, 16
      %v673 = vshrl.u32 %v472, 16
      %v674 = vpack.i.b16 %v673, %v672
      %v676 = vpack.i.b16 0, %v476
      %v677 = vshrl.u32 %v476, 16
      %v678 = vpack.i.b16 %v577, %v677
      %v679 = vcombine.low %v477, %v489
      %v681 = vunpack.c.l.s4 1983009808
      %v682 = vunpack.c.0.s8 %v681
      %v683 = vlaneseq
      %v684 = vshrl.u32 %v683, 7
      %v685 = vsub.s32 %v682, %v684
      %v686 = vrot.slane %v679, %v685
      %v687 = vcombine.low %v482, %v497
      %v689 = vunpack.c.l.s4 1983009808
      %v690 = vunpack.c.0.s8 %v689
      %v691 = vlaneseq
      %v692 = vshrl.u32 %v691, 7
      %v693 = vsub.s32 %v690, %v692
      %v694 = vrot.slane %v687, %v693
      %v695 = vcombine.low %v686, %v694
      %v696 = vcombine.high %v686, %v694
      %v698 = vunpack.c.l.s4 1934713408
      %v699 = vunpack.c.0.s8 %v698
      %v700 = vlaneseq
      %v701 = vshrl.u32 %v700, 7
      %v702 = vsub.s32 %v699, %v701
      %v703 = vrot.slane %v695, %v702
      %v705 = vunpack.c.l.s4 1934713408
      %v706 = vunpack.c.0.s8 %v705
      %v707 = vlaneseq
      %v708 = vshrl.u32 %v707, 7
      %v709 = vsub.s32 %v706, %v708
      %v710 = vrot.slane %v696, %v709
      %v711 = vcombine.high %v703, 0
      %v712 = vcombine.high %v710, 0
      %v713 = vcombine.low %v479, %v493
      %v715 = vunpack.c.l.s4 1983009808
      %v716 = vunpack.c.0.s8 %v715
      %v717 = vlaneseq
      %v718 = vshrl.u32 %v717, 7
      %v719 = vsub.s32 %v716, %v718
      %v720 = vrot.slane %v713, %v719
      %v721 = vcombine.low %v485, %v501
      %v723 = vunpack.c.l.s4 1983009808
      %v724 = vunpack.c.0.s8 %v723
      %v725 = vlaneseq
      %v726 = vshrl.u32 %v725, 7
      %v727 = vsub.s32 %v724, %v726
      %v728 = vrot.slane %v721, %v727
      %v729 = vcombine.low %v720, %v728
      %v730 = vcombine.high %v720, %v728
      %v732 = vunpack.c.l.s4 1934713408
      %v733 = vunpack.c.0.s8 %v732
      %v734 = vlaneseq
      %v735 = vshrl.u32 %v734, 7
      %v736 = vsub.s32 %v733, %v735
      %v737 = vrot.slane %v729, %v736
      %v739 = vunpack.c.l.s4 1934713408
      %v740 = vunpack.c.0.s8 %v739
      %v741 = vlaneseq
      %v742 = vshrl.u32 %v741, 7
      %v743 = vsub.s32 %v740, %v742
      %v744 = vrot.slane %v730, %v743
      %v745 = vcombine.high %v737, 0
      %v746 = vcombine.high %v744, 0
      %v747 = vcombine.low %v505, %v521
      %v749 = vunpack.c.l.s4 1983009808
      %v750 = vunpack.c.0.s8 %v749
      %v751 = vlaneseq
      %v752 = vshrl.u32 %v751, 7
      %v753 = vsub.s32 %v750, %v752
      %v754 = vrot.slane %v747, %v753
      %v755 = vcombine.low %v513, %v529
      %v757 = vunpack.c.l.s4 1983009808
      %v758 = vunpack.c.0.s8 %v757
      %v759 = vlaneseq
      %v760 = vshrl.u32 %v759, 7
      %v761 = vsub.s32 %v758, %v760
      %v762 = vrot.slane %v755, %v761
      %v763 = vcombine.low %v754, %v762
      %v764 = vcombine.high %v754, %v762
      %v766 = vunpack.c.l.s4 1934713408
      %v767 = vunpack.c.0.s8 %v766
      %v768 = vlaneseq
      %v769 = vshrl.u32 %v768, 7
      %v770 = vsub.s32 %v767, %v769
      %v771 = vrot.slane %v763, %v770
      %v773 = vunpack.c.l.s4 1934713408
      %v774 = vunpack.c.0.s8 %v773
      %v775 = vlaneseq
      %v776 = vshrl.u32 %v775, 7
      %v777 = vsub.s32 %v774, %v776
      %v778 = vrot.slane %v764, %v777
      %v779 = vcombine.high %v771, 0
      %v780 = vcombine.high %v778, 0
      %v781 = vcombine.low %v509, %v525
      %v783 = vunpack.c.l.s4 1983009808
      %v784 = vunpack.c.0.s8 %v783
      %v785 = vlaneseq
      %v786 = vshrl.u32 %v785, 7
      %v787 = vsub.s32 %v784, %v786
      %v788 = vrot.slane %v781, %v787
      %v789 = vcombine.low %v517, %v533
      %v791 = vunpack.c.l.s4 1983009808
      %v792 = vunpack.c.0.s8 %v791
      %v793 = vlaneseq
      %v794 = vshrl.u32 %v793, 7
      %v795 = vsub.s32 %v792, %v794
      %v796 = vrot.slane %v789, %v795
      %v797 = vcombine.low %v788, %v796
      %v798 = vcombine.high %v788, %v796
      %v800 = vunpack.c.l.s4 1934713408
      %v801 = vunpack.c.0.s8 %v800
      %v802 = vlaneseq
      %v803 = vshrl.u32 %v802, 7
      %v804 = vsub.s32 %v801, %v803
      %v805 = vrot.slane %v797, %v804
      %v807 = vunpack.c.l.s4 1934713408
      %v808 = vunpack.c.0.s8 %v807
      %v809 = vlaneseq
      %v810 = vshrl.u32 %v809, 7
      %v811 = vsub.s32 %v808, %v810
      %v812 = vrot.slane %v798, %v811
      %v813 = vcombine.high %v805, 0
      %v814 = vcombine.high %v812, 0
      %v815 = vcombine.low %v537, %v553
      %v817 = vunpack.c.l.s4 1983009808
      %v818 = vunpack.c.0.s8 %v817
      %v819 = vlaneseq
      %v820 = vshrl.u32 %v819, 7
      %v821 = vsub.s32 %v818, %v820
      %v822 = vrot.slane %v815, %v821
      %v823 = vcombine.low %v545, %v561
      %v825 = vunpack.c.l.s4 1983009808
      %v826 = vunpack.c.0.s8 %v825
      %v827 = vlaneseq
      %v828 = vshrl.u32 %v827, 7
      %v829 = vsub.s32 %v826, %v828
      %v830 = vrot.slane %v823, %v829
      %v831 = vcombine.low %v822, %v830
      %v832 = vcombine.high %v822, %v830
      %v834 = vunpack.c.l.s4 1934713408
      %v835 = vunpack.c.0.s8 %v834
      %v836 = vlaneseq
      %v837 = vshrl.u32 %v836, 7
      %v838 = vsub.s32 %v835, %v837
      %v839 = vrot.slane %v831, %v838
      %v841 = vunpack.c.l.s4 1934713408
      %v842 = vunpack.c.0.s8 %v841
      %v843 = vlaneseq
      %v844 = vshrl.u32 %v843, 7
      %v845 = vsub.s32 %v842, %v844
      %v846 = vrot.slane %v832, %v845
      %v847 = vcombine.high %v839, 0
      %v848 = vcombine.high %v846, 0
      %v849 = vcombine.low %v541, %v557
      %v851 = vunpack.c.l.s4 1983009808
      %v852 = vunpack.c.0.s8 %v851
      %v853 = vlaneseq
      %v854 = vshrl.u32 %v853, 7
      %v855 = vsub.s32 %v852, %v854
      %v856 = vrot.slane %v849, %v855
      %v857 = vcombine.low %v549, %v565
      %v859 = vunpack.c.l.s4 1983009808
      %v860 = vunpack.c.0.s8 %v859
      %v861 = vlaneseq
      %v862 = vshrl.u32 %v861, 7
      %v863 = vsub.s32 %v860, %v862
      %v864 = vrot.slane %v857, %v863
      %v865 = vcombine.low %v856, %v864
      %v866 = vcombine.high %v856, %v864
      %v868 = vunpack.c.l.s4 1934713408
      %v869 = vunpack.c.0.s8 %v868
      %v870 = vlaneseq
      %v871 = vshrl.u32 %v870, 7
      %v872 = vsub.s32 %v869, %v871
      %v873 = vrot.slane %v865, %v872
      %v875 = vunpack.c.l.s4 1934713408
      %v876 = vunpack.c.0.s8 %v875
      %v877 = vlaneseq
      %v878 = vshrl.u32 %v877, 7
      %v879 = vsub.s32 %v876, %v878
      %v880 = vrot.slane %v866, %v879
      %v881 = vcombine.high %v873, 0
      %v882 = vcombine.high %v880, 0
      %v885 = vunpack.c.l.s4 1983009808
      %v886 = vunpack.c.0.s8 %v885
      %v887 = vlaneseq
      %v888 = vshrl.u32 %v887, 7
      %v889 = vsub.s32 %v886, %v888
      %v890 = vrot.slane %v569, %v889
      %v893 = vunpack.c.l.s4 1983009808
      %v894 = vunpack.c.0.s8 %v893
      %v895 = vlaneseq
      %v896 = vshrl.u32 %v895, 7
      %v897 = vsub.s32 %v894, %v896
      %v898 = vrot.slane %v575, %v897
      %v899 = vcombine.low %v890, %v898
      %v900 = vcombine.high %v890, %v898
      %v902 = vunpack.c.l.s4 1934713408
      %v903 = vunpack.c.0.s8 %v902
      %v904 = vlaneseq
      %v905 = vshrl.u32 %v904, 7
      %v906 = vsub.s32 %v903, %v905
      %v907 = vrot.slane %v899, %v906
      %v909 = vunpack.c.l.s4 1934713408
      %v910 = vunpack.c.0.s8 %v909
      %v911 = vlaneseq
      %v912 = vshrl.u32 %v911, 7
      %v913 = vsub.s32 %v910, %v912
      %v914 = vrot.slane %v900, %v913
      %v915 = vcombine.high %v907, 0
      %v916 = vcombine.high %v914, 0
      %v919 = vunpack.c.l.s4 1983009808
      %v920 = vunpack.c.0.s8 %v919
      %v921 = vlaneseq
      %v922 = vshrl.u32 %v921, 7
      %v923 = vsub.s32 %v920, %v922
      %v924 = vrot.slane %v572, %v923
      %v927 = vunpack.c.l.s4 1983009808
      %v928 = vunpack.c.0.s8 %v927
      %v929 = vlaneseq
      %v930 = vshrl.u32 %v929, 7
      %v931 = vsub.s32 %v928, %v930
      %v932 = vrot.slane %v578, %v931
      %v933 = vcombine.low %v924, %v932
      %v934 = vcombine.high %v924, %v932
      %v936 = vunpack.c.l.s4 1934713408
      %v937 = vunpack.c.0.s8 %v936
      %v938 = vlaneseq
      %v939 = vshrl.u32 %v938, 7
      %v940 = vsub.s32 %v937, %v939
      %v941 = vrot.slane %v933, %v940
      %v943 = vunpack.c.l.s4 1934713408
      %v944 = vunpack.c.0.s8 %v943
      %v945 = vlaneseq
      %v946 = vshrl.u32 %v945, 7
      %v947 = vsub.s32 %v944, %v946
      %v948 = vrot.slane %v934, %v947
      %v949 = vcombine.high %v941, 0
      %v950 = vcombine.high %v948, 0
      %v951 = vcombine.low %v579, %v591
      %v953 = vunpack.c.l.s4 1983009808
      %v954 = vunpack.c.0.s8 %v953
      %v955 = vlaneseq
      %v956 = vshrl.u32 %v955, 7
      %v957 = vsub.s32 %v954, %v956
      %v958 = vrot.slane %v951, %v957
      %v959 = vcombine.low %v584, %v599
      %v961 = vunpack.c.l.s4 1983009808
      %v962 = vunpack.c.0.s8 %v961
      %v963 = vlaneseq
      %v964 = vshrl.u32 %v963, 7
      %v965 = vsub.s32 %v962, %v964
      %v966 = vrot.slane %v959, %v965
      %v967 = vcombine.low %v958, %v966
      %v968 = vcombine.high %v958, %v966
      %v970 = vunpack.c.l.s4 1934713408
      %v971 = vunpack.c.0.s8 %v970
      %v972 = vlaneseq
      %v973 = vshrl.u32 %v972, 7
      %v974 = vsub.s32 %v971, %v973
      %v975 = vrot.slane %v967, %v974
      %v977 = vunpack.c.l.s4 1934713408
      %v978 = vunpack.c.0.s8 %v977
      %v979 = vlaneseq
      %v980 = vshrl.u32 %v979, 7
      %v981 = vsub.s32 %v978, %v980
      %v982 = vrot.slane %v968, %v981
      %v983 = vcombine.high %v975, 0
      %v984 = vcombine.high %v982, 0
      %v985 = vcombine.low %v581, %v595
      %v987 = vunpack.c.l.s4 1983009808
      %v988 = vunpack.c.0.s8 %v987
      %v989 = vlaneseq
      %v990 = vshrl.u32 %v989, 7
      %v991 = vsub.s32 %v988, %v990
      %v992 = vrot.slane %v985, %v991
      %v993 = vcombine.low %v587, %v603
      %v995 = vunpack.c.l.s4 1983009808
      %v996 = vunpack.c.0.s8 %v995
      %v997 = vlaneseq
      %v998 = vshrl.u32 %v997, 7
      %v999 = vsub.s32 %v996, %v998
      %v1000 = vrot.slane %v993, %v999
      %v1001 = vcombine.low %v992, %v1000
      %v1002 = vcombine.high %v992, %v1000
      %v1004 = vunpack.c.l.s4 1934713408
      %v1005 = vunpack.c.0.s8 %v1004
      %v1006 = vlaneseq
      %v1007 = vshrl.u32 %v1006, 7
      %v1008 = vsub.s32 %v1005, %v1007
      %v1009 = vrot.slane %v1001, %v1008
      %v1011 = vunpack.c.l.s4 1934713408
      %v1012 = vunpack.c.0.s8 %v1011
      %v1013 = vlaneseq
      %v1014 = vshrl.u32 %v1013, 7
      %v1015 = vsub.s32 %v1012, %v1014
      %v1016 = vrot.slane %v1002, %v1015
      %v1017 = vcombine.high %v1009, 0
      %v1018 = vcombine.high %v1016, 0
      %v1019 = vcombine.low %v607, %v623
      %v1021 = vunpack.c.l.s4 1983009808
      %v1022 = vunpack.c.0.s8 %v1021
      %v1023 = vlaneseq
      %v1024 = vshrl.u32 %v1023, 7
      %v1025 = vsub.s32 %v1022, %v1024
      %v1026 = vrot.slane %v1019, %v1025
      %v1027 = vcombine.low %v615, %v631
      %v1029 = vunpack.c.l.s4 1983009808
      %v1030 = vunpack.c.0.s8 %v1029
      %v1031 = vlaneseq
      %v1032 = vshrl.u32 %v1031, 7
      %v1033 = vsub.s32 %v1030, %v1032
      %v1034 = vrot.slane %v1027, %v1033
      %v1035 = vcombine.low %v1026, %v1034
      %v1036 = vcombine.high %v1026, %v1034
      %v1038 = vunpack.c.l.s4 1934713408
      %v1039 = vunpack.c.0.s8 %v1038
      %v1040 = vlaneseq
      %v1041 = vshrl.u32 %v1040, 7
      %v1042 = vsub.s32 %v1039, %v1041
      %v1043 = vrot.slane %v1035, %v1042
      %v1045 = vunpack.c.l.s4 1934713408
      %v1046 = vunpack.c.0.s8 %v1045
      %v1047 = vlaneseq
      %v1048 = vshrl.u32 %v1047, 7
      %v1049 = vsub.s32 %v1046, %v1048
      %v1050 = vrot.slane %v1036, %v1049
      %v1051 = vcombine.high %v1043, 0
      %v1052 = vcombine.high %v1050, 0
      %v1053 = vcombine.low %v611, %v627
      %v1055 = vunpack.c.l.s4 1983009808
      %v1056 = vunpack.c.0.s8 %v1055
      %v1057 = vlaneseq
      %v1058 = vshrl.u32 %v1057, 7
      %v1059 = vsub.s32 %v1056, %v1058
      %v1060 = vrot.slane %v1053, %v1059
      %v1061 = vcombine.low %v619, %v635
      %v1063 = vunpack.c.l.s4 1983009808
      %v1064 = vunpack.c.0.s8 %v1063
      %v1065 = vlaneseq
      %v1066 = vshrl.u32 %v1065, 7
      %v1067 = vsub.s32 %v1064, %v1066
      %v1068 = vrot.slane %v1061, %v1067
      %v1069 = vcombine.low %v1060, %v1068
      %v1070 = vcombine.high %v1060, %v1068
      %v1072 = vunpack.c.l.s4 1934713408
      %v1073 = vunpack.c.0.s8 %v1072
      %v1074 = vlaneseq
      %v1075 = vshrl.u32 %v1074, 7
      %v1076 = vsub.s32 %v1073, %v1075
      %v1077 = vrot.slane %v1069, %v1076
      %v1079 = vunpack.c.l.s4 1934713408
      %v1080 = vunpack.c.0.s8 %v1079
      %v1081 = vlaneseq
      %v1082 = vshrl.u32 %v1081, 7
      %v1083 = vsub.s32 %v1080, %v1082
      %v1084 = vrot.slane %v1070, %v1083
      %v1085 = vcombine.high %v1077, 0
      %v1086 = vcombine.high %v1084, 0
      %v1087 = vcombine.low %v639, %v655
      %v1089 = vunpack.c.l.s4 1983009808
      %v1090 = vunpack.c.0.s8 %v1089
      %v1091 = vlaneseq
      %v1092 = vshrl.u32 %v1091, 7
      %v1093 = vsub.s32 %v1090, %v1092
      %v1094 = vrot.slane %v1087, %v1093
      %v1095 = vcombine.low %v647, %v663
      %v1097 = vunpack.c.l.s4 1983009808
      %v1098 = vunpack.c.0.s8 %v1097
      %v1099 = vlaneseq
      %v1100 = vshrl.u32 %v1099, 7
      %v1101 = vsub.s32 %v1098, %v1100
      %v1102 = vrot.slane %v1095, %v1101
      %v1103 = vcombine.low %v1094, %v1102
      %v1104 = vcombine.high %v1094, %v1102
      %v1106 = vunpack.c.l.s4 1934713408
      %v1107 = vunpack.c.0.s8 %v1106
      %v1108 = vlaneseq
      %v1109 = vshrl.u32 %v1108, 7
      %v1110 = vsub.s32 %v1107, %v1109
      %v1111 = vrot.slane %v1103, %v1110
      %v1113 = vunpack.c.l.s4 1934713408
      %v1114 = vunpack.c.0.s8 %v1113
      %v1115 = vlaneseq
      %v1116 = vshrl.u32 %v1115, 7
      %v1117 = vsub.s32 %v1114, %v1116
      %v1118 = vrot.slane %v1104, %v1117
      %v1119 = vcombine.high %v1111, 0
      %v1120 = vcombine.high %v1118, 0
      %v1121 = vcombine.low %v643, %v659
      %v1123 = vunpack.c.l.s4 1983009808
      %v1124 = vunpack.c.0.s8 %v1123
      %v1125 = vlaneseq
      %v1126 = vshrl.u32 %v1125, 7
      %v1127 = vsub.s32 %v1124, %v1126
      %v1128 = vrot.slane %v1121, %v1127
      %v1129 = vcombine.low %v651, %v667
      %v1131 = vunpack.c.l.s4 1983009808
      %v1132 = vunpack.c.0.s8 %v1131
      %v1133 = vlaneseq
      %v1134 = vshrl.u32 %v1133, 7
      %v1135 = vsub.s32 %v1132, %v1134
      %v1136 = vrot.slane %v1129, %v1135
      %v1137 = vcombine.low %v1128, %v1136
      %v1138 = vcombine.high %v1128, %v1136
      %v1140 = vunpack.c.l.s4 1934713408
      %v1141 = vunpack.c.0.s8 %v1140
      %v1142 = vlaneseq
      %v1143 = vshrl.u32 %v1142, 7
      %v1144 = vsub.s32 %v1141, %v1143
      %v1145 = vrot.slane %v1137, %v1144
      %v1147 = vunpack.c.l.s4 1934713408
      %v1148 = vunpack.c.0.s8 %v1147
      %v1149 = vlaneseq
      %v1150 = vshrl.u32 %v1149, 7
      %v1151 = vsub.s32 %v1148, %v1150
      %v1152 = vrot.slane %v1138, %v1151
      %v1153 = vcombine.high %v1145, 0
      %v1154 = vcombine.high %v1152, 0
      %v1157 = vunpack.c.l.s4 1983009808
      %v1158 = vunpack.c.0.s8 %v1157
      %v1159 = vlaneseq
      %v1160 = vshrl.u32 %v1159, 7
      %v1161 = vsub.s32 %v1158, %v1160
      %v1162 = vrot.slane %v671, %v1161
      %v1165 = vunpack.c.l.s4 1983009808
      %v1166 = vunpack.c.0.s8 %v1165
      %v1167 = vlaneseq
      %v1168 = vshrl.u32 %v1167, 7
      %v1169 = vsub.s32 %v1166, %v1168
      %v1170 = vrot.slane %v676, %v1169
      %v1171 = vcombine.low %v1162, %v1170
      %v1172 = vcombine.high %v1162, %v1170
      %v1174 = vunpack.c.l.s4 1934713408
      %v1175 = vunpack.c.0.s8 %v1174
      %v1176 = vlaneseq
      %v1177 = vshrl.u32 %v1176, 7
      %v1178 = vsub.s32 %v1175, %v1177
      %v1179 = vrot.slane %v1171, %v1178
      %v1181 = vunpack.c.l.s4 1934713408
      %v1182 = vunpack.c.0.s8 %v1181
      %v1183 = vlaneseq
      %v1184 = vshrl.u32 %v1183, 7
      %v1185 = vsub.s32 %v1182, %v1184
      %v1186 = vrot.slane %v1172, %v1185
      %v1187 = vcombine.high %v1179, 0
      %v1188 = vcombine.high %v1186, 0
      %v1191 = vunpack.c.l.s4 1983009808
      %v1192 = vunpack.c.0.s8 %v1191
      %v1193 = vlaneseq
      %v1194 = vshrl.u32 %v1193, 7
      %v1195 = vsub.s32 %v1192, %v1194
      %v1196 = vrot.slane %v674, %v1195
      %v1199 = vunpack.c.l.s4 1983009808
      %v1200 = vunpack.c.0.s8 %v1199
      %v1201 = vlaneseq
      %v1202 = vshrl.u32 %v1201, 7
      %v1203 = vsub.s32 %v1200, %v1202
      %v1204 = vrot.slane %v678, %v1203
      %v1205 = vcombine.low %v1196, %v1204
      %v1206 = vcombine.high %v1196, %v1204
      %v1208 = vunpack.c.l.s4 1934713408
      %v1209 = vunpack.c.0.s8 %v1208
      %v1210 = vlaneseq
      %v1211 = vshrl.u32 %v1210, 7
      %v1212 = vsub.s32 %v1209, %v1211
      %v1213 = vrot.slane %v1205, %v1212
      %v1215 = vunpack.c.l.s4 1934713408
      %v1216 = vunpack.c.0.s8 %v1215
      %v1217 = vlaneseq
      %v1218 = vshrl.u32 %v1217, 7
      %v1219 = vsub.s32 %v1216, %v1218
      %v1220 = vrot.slane %v1206, %v1219
      %v1221 = vcombine.high %v1213, 0
      %v1222 = vcombine.high %v1220, 0
      %v1227 = vunpack.c.l.b16 %v703
      %v1228 = vunpack.c.l.b16 %v771
      %v1229 = vunpack.c.l.b16 %v839
      %v1230 = vunpack.c.l.b16 %v907
      %v1231 = vpack.c.b16 %v1228, %v1227
      %v1232 = vpack.c.b16 %v1230, %v1229
      %v1237 = vunpack.c.l.b16 %v737
      %v1238 = vunpack.c.l.b16 %v805
      %v1239 = vunpack.c.l.b16 %v873
      %v1240 = vunpack.c.l.b16 %v941
      %v1241 = vpack.c.b16 %v1238, %v1237
      %v1242 = vpack.c.b16 %v1240, %v1239
      %1243 = vrot.lane.b32.xlu0 %v1241, 16
      %v1244 = vpop.permute.xlu0 %1243
      %1245 = vrot.lane.b32.xlu0 %v1242, 16
      %v1246 = vpop.permute.xlu0 %1245
      %v1251 = vunpack.c.l.b16 %v711
      %v1252 = vunpack.c.l.b16 %v779
      %v1253 = vunpack.c.l.b16 %v847
      %v1254 = vunpack.c.l.b16 %v915
      %v1255 = vpack.c.b16 %v1252, %v1251
      %v1256 = vpack.c.b16 %v1254, %v1253
      %1257 = vrot.lane.b32.xlu0 %v1255, 32
      %v1258 = vpop.permute.xlu0 %1257
      %1259 = vrot.lane.b32.xlu0 %v1256, 32
      %v1260 = vpop.permute.xlu0 %1259
      %v1265 = vunpack.c.l.b16 %v745
      %v1266 = vunpack.c.l.b16 %v813
      %v1267 = vunpack.c.l.b16 %v881
      %v1268 = vunpack.c.l.b16 %v949
      %v1269 = vpack.c.b16 %v1266, %v1265
      %v1270 = vpack.c.b16 %v1268, %v1267
      %1271 = vrot.lane.b32.xlu0 %v1269, 48
      %v1272 = vpop.permute.xlu0 %1271
      %1273 = vrot.lane.b32.xlu0 %v1270, 48
      %v1274 = vpop.permute.xlu0 %1273
      %v1279 = vunpack.c.l.b16 %v710
      %v1280 = vunpack.c.l.b16 %v778
      %v1281 = vunpack.c.l.b16 %v846
      %v1282 = vunpack.c.l.b16 %v914
      %v1283 = vpack.c.b16 %v1280, %v1279
      %v1284 = vpack.c.b16 %v1282, %v1281
      %1285 = vrot.lane.b32.xlu0 %v1283, 64
      %v1286 = vpop.permute.xlu0 %1285
      %1287 = vrot.lane.b32.xlu0 %v1284, 64
      %v1288 = vpop.permute.xlu0 %1287
      %v1293 = vunpack.c.l.b16 %v744
      %v1294 = vunpack.c.l.b16 %v812
      %v1295 = vunpack.c.l.b16 %v880
      %v1296 = vunpack.c.l.b16 %v948
      %v1297 = vpack.c.b16 %v1294, %v1293
      %v1298 = vpack.c.b16 %v1296, %v1295
      %1299 = vrot.lane.b32.xlu0 %v1297, 80
      %v1300 = vpop.permute.xlu0 %1299
      %1301 = vrot.lane.b32.xlu0 %v1298, 80
      %v1302 = vpop.permute.xlu0 %1301
      %v1307 = vunpack.c.l.b16 %v712
      %v1308 = vunpack.c.l.b16 %v780
      %v1309 = vunpack.c.l.b16 %v848
      %v1310 = vunpack.c.l.b16 %v916
      %v1311 = vpack.c.b16 %v1308, %v1307
      %v1312 = vpack.c.b16 %v1310, %v1309
      %1313 = vrot.lane.b32.xlu0 %v1311, 96
      %v1314 = vpop.permute.xlu0 %1313
      %1315 = vrot.lane.b32.xlu0 %v1312, 96
      %v1316 = vpop.permute.xlu0 %1315
      %v1321 = vunpack.c.l.b16 %v746
      %v1322 = vunpack.c.l.b16 %v814
      %v1323 = vunpack.c.l.b16 %v882
      %v1324 = vunpack.c.l.b16 %v950
      %v1325 = vpack.c.b16 %v1322, %v1321
      %v1326 = vpack.c.b16 %v1324, %v1323
      %1327 = vrot.lane.b32.xlu0 %v1325, 112
      %v1328 = vpop.permute.xlu0 %1327
      %1329 = vrot.lane.b32.xlu0 %v1326, 112
      %v1330 = vpop.permute.xlu0 %1329
      %v1335 = vunpack.c.l.b16 %v975
      %v1336 = vunpack.c.l.b16 %v1043
      %v1337 = vunpack.c.l.b16 %v1111
      %v1338 = vunpack.c.l.b16 %v1179
      %v1339 = vpack.c.b16 %v1336, %v1335
      %v1340 = vpack.c.b16 %v1338, %v1337
      %v1345 = vunpack.c.l.b16 %v1009
      %v1346 = vunpack.c.l.b16 %v1077
      %v1347 = vunpack.c.l.b16 %v1145
      %v1348 = vunpack.c.l.b16 %v1213
      %v1349 = vpack.c.b16 %v1346, %v1345
      %v1350 = vpack.c.b16 %v1348, %v1347
      %1351 = vrot.lane.b32.xlu0 %v1349, 16
      %v1352 = vpop.permute.xlu0 %1351
      %1353 = vrot.lane.b32.xlu0 %v1350, 16
      %v1354 = vpop.permute.xlu0 %1353
      %v1359 = vunpack.c.l.b16 %v983
      %v1360 = vunpack.c.l.b16 %v1051
      %v1361 = vunpack.c.l.b16 %v1119
      %v1362 = vunpack.c.l.b16 %v1187
      %v1363 = vpack.c.b16 %v1360, %v1359
      %v1364 = vpack.c.b16 %v1362, %v1361
      %1365 = vrot.lane.b32.xlu0 %v1363, 32
      %v1366 = vpop.permute.xlu0 %1365
      %1367 = vrot.lane.b32.xlu0 %v1364, 32
      %v1368 = vpop.permute.xlu0 %1367
      %v1373 = vunpack.c.l.b16 %v1017
      %v1374 = vunpack.c.l.b16 %v1085
      %v1375 = vunpack.c.l.b16 %v1153
      %v1376 = vunpack.c.l.b16 %v1221
      %v1377 = vpack.c.b16 %v1374, %v1373
      %v1378 = vpack.c.b16 %v1376, %v1375
      %1379 = vrot.lane.b32.xlu0 %v1377, 48
      %v1380 = vpop.permute.xlu0 %1379
      %1381 = vrot.lane.b32.xlu0 %v1378, 48
      %v1382 = vpop.permute.xlu0 %1381
      %v1387 = vunpack.c.l.b16 %v982
      %v1388 = vunpack.c.l.b16 %v1050
      %v1389 = vunpack.c.l.b16 %v1118
      %v1390 = vunpack.c.l.b16 %v1186
      %v1391 = vpack.c.b16 %v1388, %v1387
      %v1392 = vpack.c.b16 %v1390, %v1389
      %1393 = vrot.lane.b32.xlu0 %v1391, 64
      %v1394 = vpop.permute.xlu0 %1393
      %1395 = vrot.lane.b32.xlu0 %v1392, 64
      %v1396 = vpop.permute.xlu0 %1395
      %v1401 = vunpack.c.l.b16 %v1016
      %v1402 = vunpack.c.l.b16 %v1084
      %v1403 = vunpack.c.l.b16 %v1152
      %v1404 = vunpack.c.l.b16 %v1220
      %v1405 = vpack.c.b16 %v1402, %v1401
      %v1406 = vpack.c.b16 %v1404, %v1403
      %1407 = vrot.lane.b32.xlu0 %v1405, 80
      %v1408 = vpop.permute.xlu0 %1407
      %1409 = vrot.lane.b32.xlu0 %v1406, 80
      %v1410 = vpop.permute.xlu0 %1409
      %v1415 = vunpack.c.l.b16 %v984
      %v1416 = vunpack.c.l.b16 %v1052
      %v1417 = vunpack.c.l.b16 %v1120
      %v1418 = vunpack.c.l.b16 %v1188
      %v1419 = vpack.c.b16 %v1416, %v1415
      %v1420 = vpack.c.b16 %v1418, %v1417
      %1421 = vrot.lane.b32.xlu0 %v1419, 96
      %v1422 = vpop.permute.xlu0 %1421
      %1423 = vrot.lane.b32.xlu0 %v1420, 96
      %v1424 = vpop.permute.xlu0 %1423
      %v1429 = vunpack.c.l.b16 %v1018
      %v1430 = vunpack.c.l.b16 %v1086
      %v1431 = vunpack.c.l.b16 %v1154
      %v1432 = vunpack.c.l.b16 %v1222
      %v1433 = vpack.c.b16 %v1430, %v1429
      %v1434 = vpack.c.b16 %v1432, %v1431
      %1435 = vrot.lane.b32.xlu0 %v1433, 112
      %v1436 = vpop.permute.xlu0 %1435
      %1437 = vrot.lane.b32.xlu0 %v1434, 112
      %v1438 = vpop.permute.xlu0 %1437
      %vm1439 = vcmask 130048
      %v1442 = vsel %vm1439, %v1231, %v1244
      %v1445 = vsel %vm1439, %v1232, %v1246
      %vm1446 = vcmask 261120
      %v1448 = vsel %vm1446, %v1442, %v1258
      %v1450 = vsel %vm1446, %v1445, %v1260
      %vm1451 = vcmask 392192
      %v1453 = vsel %vm1451, %v1448, %v1272
      %v1455 = vsel %vm1451, %v1450, %v1274
      %vm1456 = vcmask 523264
      %v1458 = vsel %vm1456, %v1453, %v1286
      %v1460 = vsel %vm1456, %v1455, %v1288
      %vm1461 = vcmask 654336
      %v1463 = vsel %vm1461, %v1458, %v1300
      %v1465 = vsel %vm1461, %v1460, %v1302
      %vm1466 = vcmask 785408
      %v1468 = vsel %vm1466, %v1463, %v1314
      %v1470 = vsel %vm1466, %v1465, %v1316
      %vm1471 = vcmask 916480
      %v1473 = vsel %vm1471, %v1468, %v1328
      %v1476 = vsel %vm1471, %v1470, %v1330
      %v1479 = vsel %vm1439, %v1339, %v1352
      %v1482 = vsel %vm1439, %v1340, %v1354
      %v1484 = vsel %vm1446, %v1479, %v1366
      %v1486 = vsel %vm1446, %v1482, %v1368
      %v1488 = vsel %vm1451, %v1484, %v1380
      %v1490 = vsel %vm1451, %v1486, %v1382
      %v1492 = vsel %vm1456, %v1488, %v1394
      %v1494 = vsel %vm1456, %v1490, %v1396
      %v1496 = vsel %vm1461, %v1492, %v1408
      %v1498 = vsel %vm1461, %v1494, %v1410
      %v1500 = vsel %vm1466, %v1496, %v1422
      %v1502 = vsel %vm1466, %v1498, %v1424
      %v1504 = vsel %vm1471, %v1500, %v1436
      %v1507 = vsel %vm1471, %v1502, %v1438
      %v1508 = vld [vmem:[%s1] sm:$0xf]
      %v1509 = vld [vmem:[%s1 + $0x4] sm:$0xf]
      %v1510 = vld [vmem:[%s1 + $0x8] sm:$0xf]
      %v1511 = vld [vmem:[%s1 + $0xc] sm:$0xf]
      %v1512 = vld [vmem:[%s1 + $0x10] sm:$0xf]
      %v1513 = vld [vmem:[%s1 + $0x14] sm:$0xf]
      %v1520 = vunpack.c.l.b16 %v1508
      %v1521 = vunpack.c.l.b16 %v1509
      %v1522 = vunpack.c.l.b16 %v1510
      %v1523 = vunpack.c.l.b16 %v1511
      %v1524 = vunpack.c.l.b16 %v1512
      %v1525 = vunpack.c.l.b16 %v1513
      %v1526 = vpack.c.b16 %v1521, %v1520
      %v1527 = vpack.c.b16 %v1523, %v1522
      %v1528 = vpack.c.b16 %v1525, %v1524
      %vm1529 = vcmask 220160
      %v1531 = vsel %vm1529, %v1526, 0
      %v1534 = vsel %vm1529, %v1527, 0
      %v1537 = vsel %vm1529, %v1528, 0
      %vm1539 = vcmask 1044480
      %vm1540 = vcmask 1045504
      %v1541 = vsel %vm1539, 4294967295, 65535
      %v1542 = vsel %vm1540, %v1541, 0
      %v1543 = vand.u32 %v1476, %v1542
      %v1545 = vand.u32 %v1507, %v1542
      %1547 = vmatprep.subr.bf16.mxu0 0
      %1548 = vmatpush1.bf16.msra.mxu0 0
      %1549 = vmatprep.subr.bf16.mxu0 0
      %1550 = vmatpush1.bf16.msra.mxu0 0
      %1551 = vmatprep.subr.bf16.mxu0 0
      %1552 = vmatpush1.bf16.msra.mxu0 0
      %1553 = vmatprep.subr.bf16.mxu0 0
      %1554 = vmatpush1.bf16.msra.mxu0 0
      %1555 = vmatprep.subr.bf16.mxu0 0
      %1556 = vmatpush1.bf16.msra.mxu0 0
      %1557 = vmatprep.subr.bf16.mxu0 0
      %1558 = vmatpush1.bf16.msra.mxu0 0
      %1559 = vmatprep.subr.bf16.mxu0 %v1545
      %1560 = vmatpush1.bf16.msra.mxu0 %v1543
      %1561 = vmatprep.subr.bf16.mxu0 %v1504
      %1562 = vmatpush1.bf16.msra.mxu0 %v1473
      %1563 = vmatprep.subr.bf16.mxu0 0
      %1564 = vmatpush2.bf16.msra.mxu0 0
      %1565 = vmatprep.subr.bf16.mxu0 0
      %1566 = vmatpush2.bf16.msra.mxu0 0
      %1567 = vmatprep.subr.bf16.mxu0 0
      %1568 = vmatpush2.bf16.msra.mxu0 0
      %1569 = vmatprep.subr.bf16.mxu0 0
      %1570 = vmatpush2.bf16.msra.mxu0 0
      %1571 = vmatprep.subr.bf16.mxu0 0
      %1572 = vmatpush2.bf16.msra.mxu0 0
      %1573 = vmatprep.subr.bf16.mxu0 0
      %1574 = vmatpush2.bf16.msra.mxu0 0
      %1575 = vmatprep.subr.bf16.mxu0 0
      %1576 = vmatpush2.bf16.msra.mxu0 0
      %1577 = vmatprep.subr.bf16.mxu0 0
      %1578 = vmatpush2.bf16.msra.mxu0 0
      %1579 = vmatprep.mubr.bf16.mxu0 0
      %1580 = vmatmul.mubr.bf16.gmra.mxu0 %v1531
      %v1581 = vpop.f32.mrf.mxu0
      %v1582 = vadd.f32 0.0, %v1581
      %v1583 = vpop.f32.mrf.mxu0
      %v1584 = vadd.f32 0.0, %v1583
      %v1585 = vpop.f32.mrf.mxu0
      %v1586 = vadd.f32 0.0, %v1585
      %v1587 = vpop.f32.mrf.mxu0
      %v1588 = vadd.f32 0.0, %v1587
      %1589 = vmatprep.mubr.bf16.mxu0 0
      %1590 = vmatmul.mubr.bf16.gmra.mxu0 %v1534
      %v1591 = vpop.f32.mrf.mxu0
      %v1592 = vadd.f32 0.0, %v1591
      %v1593 = vpop.f32.mrf.mxu0
      %v1594 = vadd.f32 0.0, %v1593
      %v1595 = vpop.f32.mrf.mxu0
      %v1596 = vadd.f32 0.0, %v1595
      %v1597 = vpop.f32.mrf.mxu0
      %v1598 = vadd.f32 0.0, %v1597
      %1599 = vmatprep.mubr.bf16.mxu0 0
      %1600 = vmatmul.mubr.bf16.gmra.mxu0 %v1537
      %v1601 = vpop.f32.mrf.mxu0
      %v1602 = vadd.f32 0.0, %v1601
      %v1603 = vpop.f32.mrf.mxu0
      %v1604 = vadd.f32 0.0, %v1603
      %v1605 = vpop.f32.mrf.mxu0
      %v1606 = vadd.f32 0.0, %v1605
      %v1607 = vpop.f32.mrf.mxu0
      %v1608 = vadd.f32 0.0, %v1607
      %1609 = vdwg.mxu0
      %1610 = vst [vmem:[%s143] sm:$0xff] %v1582
      %1611 = vst [vmem:[%s143 + $0x8] sm:$0xff] %v1584
      %1612 = vst [vmem:[%s143 + $0x10] sm:$0xff] %v1586
      %1613 = vst [vmem:[%s143 + $0x18] sm:$0xff] %v1588
      %1614 = vst [vmem:[%s143 + $0x20] sm:$0xff] %v1592
      %1615 = vst [vmem:[%s143 + $0x28] sm:$0xff] %v1594
      %1616 = vst [vmem:[%s143 + $0x30] sm:$0xff] %v1596
      %1617 = vst [vmem:[%s143 + $0x38] sm:$0xff] %v1598
      %1618 = vst [vmem:[%s143 + $0x40] sm:$0xff] %v1602
      %1619 = vst [vmem:[%s143 + $0x48] sm:$0xff] %v1604
      %1620 = vst [vmem:[%s143 + $0x50] sm:$0xff] %v1606
      %1621 = vst [vmem:[%s143 + $0x58] sm:$0xff] %v1608
      %p1622 = scmp.lt.s32.totalorder %s13, 1
      %s1623 = scalar_select %p1622, %s13, 1
      %s1624 = smul.addr %s1623, 12
      %s1625 = smul.addr %s1624, 8
      %s1626 = scalar_lea.vmem %s2, %s1625
      // Predicated region
      $region29: #{_lambda_.1} parent=27 // pred_check
        %p1627 = pneg %p78
      $region30: #{_lambda_.1} parent=27 // pred_check_branch
        %1629 = sbr.rel (%p1627) target = $region32
      $region31: #{_lambda_.1} parent=27 // pred_region
        _
      $region32: #{_lambda_.1} parent=27 // pred_fallthru
        _
    $region28: #{_lambda_.1} parent=5 // pred_fallthru
      _
    %p1630 = scmp.le.s32.totalorder 2, %s8
    // Predicated region
    $region33: #{_lambda_.1} parent=5 // pred_check
      %p1631 = pneg %p1630
    $region34: #{_lambda_.1} parent=5 // pred_check_branch
      %1633 = sbr.rel (%p1631) target = $region36
    $region35: #{_lambda_.1} parent=5 // pred_region
      %s1634 = ssub.s32 %s8, 2
      // Predicated region
      $region37: #{_lambda_.1} parent=35 // pred_check
        %p1635 = pneg %p84
      $region38: #{_lambda_.1} parent=35 // pred_check_branch
        %1637 = sbr.rel (%p1635) target = $region40
      $region39: #{_lambda_.1} parent=35 // pred_region
        %p1638 = scmp.lt.s32.totalorder %s14, 1
        %s1639 = scalar_select %p1638, %s14, 1
        %s1640 = smul.addr %s1639, 12
        %s1641 = smul.addr %s1640, 8
        %s1642 = scalar_lea.vmem %s2, %s1641
      $region40: #{_lambda_.1} parent=35 // pred_fallthru
        _
    $region36: #{_lambda_.1} parent=5 // pred_fallthru
      _
  $region6: #{_lambda_.1} parent=0 // loop_footer
    %s12 = sadd.s32 1, %s8
  $region7: #{_lambda_.1} parent=0 // loop_footer_branch
    %7 = sbr.rel target = $region3
  $region8: #{_lambda_.1} parent=0 // loop_exit
    _

</llo_original>
